<compile_context>
chip_gen: v5e
topology: v5e:2x2
jax: 0.10.0
libtpu: 0.0.40
codegen_flags: <defaults>
</compile_context>

<pallas_src>
import jax
import jax.numpy as jnp
from jax import lax
from jax.experimental import pallas as pl
from jax.experimental.pallas import tpu as pltpu

IN_FEATURES = 512 * 4   # fixed by the module: nn.Linear(512*4, num_classes)
NUM_CLASSES = 10
N_PAD = 128             # lane-dense output width
TM_DEFAULT = 1024       # batch tile: 8 MiB/buf of x -> fits v7x 32 MiB scoped VMEM x2-buffered


def _round_up(x, m):
    return ((x + m - 1) // m) * m


def linear_kernel(x_ref, w_ref, b_ref, o_ref):
    # x_ref: (TM, K) f32, w_ref: (N_PAD, K) f32, b_ref: (1, N_PAD) f32, o_ref: (TM, N_PAD) f32
    acc = lax.dot_general(
        x_ref[...], w_ref[...],
        dimension_numbers=(((1,), (1,)), ((), ())),   # contract K with K (RHS kept (N, K))
        preferred_element_type=jnp.float32,
    )
    o_ref[...] = (acc + b_ref[...]).astype(o_ref.dtype)


def prepare_fc_params(weight, bias, n_pad=N_PAD):
    """One-time (param-load-time) prep: zero-pad N from num_classes to a lane-dense 128.

    weight: (num_classes, in_features) PyTorch layout, bias: (num_classes,)
    """
    n, k = weight.shape
    n_pad = max(n_pad, _round_up(n, 128))
    w_pad = jnp.zeros((n_pad, k), weight.dtype).at[:n, :].set(weight)
    b_pad = jnp.zeros((1, n_pad), bias.dtype).at[0, :n].set(bias)
    return w_pad, b_pad


def resnet_end_linear(x, w_padded, b_padded, num_classes=NUM_CLASSES, *, tm=TM_DEFAULT):
    """x: (B, 2048) f32; w_padded: (N_PAD, 2048); b_padded: (1, N_PAD). Returns (B, num_classes)."""
    B, K = x.shape
    n_pad = w_padded.shape[0]

    # Batch tiling: tile of TM rows, padded so the grid divides evenly and the
    # (8, 128) tiling rule holds for the x / output blocks.
    tm = min(tm, _round_up(B, 8))
    B_pad = _round_up(B, tm)
    if B_pad != B:
        x = jnp.pad(x, ((0, B_pad - B), (0, 0)))
    grid = (B_pad // tm,)

    out = pl.pallas_call(
        linear_kernel,
        out_shape=jax.ShapeDtypeStruct((B_pad, n_pad), x.dtype),
        grid_spec=pl.GridSpec(
            grid=grid,
            in_specs=[
                pl.BlockSpec((tm, K), lambda i: (i, 0)),        # streamed x tiles
                pl.BlockSpec((n_pad, K), lambda i: (0, 0)),     # weight resident across grid
                pl.BlockSpec((1, n_pad), lambda i: (0, 0)),     # bias resident across grid
            ],
            out_specs=pl.BlockSpec((tm, n_pad), lambda i: (i, 0)),
        ),
        compiler_params=pltpu.CompilerParams(
            dimension_semantics=("parallel",),                  # independent batch tiles (megacore on v7x)
        ),
        cost_estimate=pl.CostEstimate(
            flops=2 * B_pad * K * n_pad,
            transcendentals=0,
            bytes_accessed=B_pad * K * 4 + n_pad * K * 4 + B_pad * n_pad * 4,
        ),
    )(x, w_padded, b_padded)

    # Slice padded rows / padded classes back off.
    return out[:B, :num_classes]


if __name__ == "__main__":
    key = jax.random.PRNGKey(0)
    kx, kw, kb = jax.random.split(key, 3)

    batch = 2
    # Deterministic parameter init mimicking nn.Linear default: U(-1/sqrt(K), 1/sqrt(K))
    bound = 1.0 / (IN_FEATURES ** 0.5)
    weight = jax.random.uniform(
        kw, (NUM_CLASSES, IN_FEATURES), jnp.float32, minval=-bound, maxval=bound
    )
    bias = jax.random.uniform(
        kb, (NUM_CLASSES,), jnp.float32, minval=-bound, maxval=bound
    )
    x = jax.random.normal(kx, (batch, IN_FEATURES), jnp.float32)

    # One-time param prep (would live at parameter-load time in a real model).
    w_padded, b_padded = prepare_fc_params(weight, bias)

    out = resnet_end_linear(x, w_padded, b_padded, NUM_CLASSES)
    out = jax.block_until_ready(out)

    # Correctness check against pure-JAX reference
    ref = x @ weight.T + bias
    assert out.shape == (batch, NUM_CLASSES)
    assert jnp.allclose(out, ref, atol=1e-4, rtol=1e-4)
    print("KERNEL_OK")
</pallas_src>

<mosaic_0001>
module attributes {stable_mosaic.version = 11 : i64} {
  func.func @linear_kernel(%arg0: i32, %arg1: memref<8x2048xf32, #tpu.memory_space<vmem>>, %arg2: memref<128x2048xf32, #tpu.memory_space<vmem>>, %arg3: memref<1x128xf32, #tpu.memory_space<vmem>>, %arg4: memref<8x128xf32, #tpu.memory_space<vmem>>) attributes {dimension_semantics = [#tpu.dimension_semantics<parallel>], iteration_bounds = array<i64: 1>, scalar_prefetch = 0 : i64, scratch_operands = 0 : i64, tpu.core_type = #tpu.core_type<tc>, window_params = [{transform_indices = @transform_0, window_bounds = array<i64: 8, 2048>}, {pipeline_mode = #tpu.pipeline_mode<synchronous>, transform_indices = @transform_1, window_bounds = array<i64: 128, 2048>}, {pipeline_mode = #tpu.pipeline_mode<synchronous>, transform_indices = @transform_2, window_bounds = array<i64: 1, 128>}, {transform_indices = @transform_3, window_bounds = array<i64: 8, 128>}]} {
    %c0 = arith.constant 0 : index
    %c0_0 = arith.constant 0 : index
    %0 = vector.load %arg1[%c0, %c0_0] : memref<8x2048xf32, #tpu.memory_space<vmem>>, vector<8x2048xf32>
    %c0_1 = arith.constant 0 : index
    %c0_2 = arith.constant 0 : index
    %1 = vector.load %arg2[%c0_1, %c0_2] : memref<128x2048xf32, #tpu.memory_space<vmem>>, vector<128x2048xf32>
    %cst = arith.constant dense<0.000000e+00> : vector<8x128xf32>
    %2 = tpu.matmul %0, %1, %cst {dimension_numbers = #tpu.dot_dimension_numbers<[1], [1], [0], [0], [0, 0, 1, 0], [], []>} : vector<8x2048xf32>, vector<128x2048xf32>, vector<8x128xf32> -> vector<8x128xf32>
    %c0_3 = arith.constant 0 : index
    %c0_4 = arith.constant 0 : index
    %3 = vector.load %arg3[%c0_3, %c0_4] : memref<1x128xf32, #tpu.memory_space<vmem>>, vector<1x128xf32>
    %4 = vector.broadcast %3 : vector<1x128xf32> to vector<8x128xf32>
    %5 = arith.addf %2, %4 : vector<8x128xf32>
    %c0_5 = arith.constant 0 : index
    %c0_6 = arith.constant 0 : index
    %6 = vector.load %arg4[%c0_5, %c0_6] : memref<8x128xf32, #tpu.memory_space<vmem>>, vector<8x128xf32>
    tpu.vector_store %arg4[%c0_5, %c0_6], %5 {strides = array<i32>} : memref<8x128xf32, #tpu.memory_space<vmem>>, vector<8x128xf32>,
    return
  }
  func.func @transform_0(%arg0: i32) -> (i32, i32) {
    %c0_i32 = arith.constant 0 : i32
    %c0_i32_0 = arith.constant 0 : i32
    return %arg0, %c0_i32 : i32, i32
  }
  func.func @transform_1(%arg0: i32) -> (i32, i32) {
    %c0_i32 = arith.constant 0 : i32
    %c0_i32_0 = arith.constant 0 : i32
    %c0_i32_1 = arith.constant 0 : i32
    return %c0_i32, %c0_i32_0 : i32, i32
  }
  func.func @transform_2(%arg0: i32) -> (i32, i32) {
    %c0_i32 = arith.constant 0 : i32
    %c0_i32_0 = arith.constant 0 : i32
    %c0_i32_1 = arith.constant 0 : i32
    return %c0_i32, %c0_i32_0 : i32, i32
  }
  func.func @transform_3(%arg0: i32) -> (i32, i32) {
    %c0_i32 = arith.constant 0 : i32
    %c0_i32_0 = arith.constant 0 : i32
    return %arg0, %c0_i32 : i32, i32
  }
}

</mosaic_0001>

<llo_original>
// kernel: tpu_custom_call.1
$region0: #{tpu_custom_call.1}
  #allocation0 [shape = 'u32[]', space=smem, size = 0x4, offset = 0x4, fixed_abs, tag = 'smem constant byte address 0x4 - core index']
  #allocation1 [shape = 'u32[72,128]{1,0:T(1,128)}', space=vmem, size = 0x9000, scoped, tag = 'internal scratch']
  %s0 = inlined_call_operand.hbm [shape: f32[8,2048], index: 0, kind: input, shape index: {}]
  %s1 = inlined_call_operand.hbm [shape: f32[128,2048], index: 1, kind: input, shape index: {}]
  %s2 = inlined_call_operand.vmem [shape: f32[1,128], index: 2, kind: input, shape index: {}]
  %s3 = inlined_call_operand.hbm [shape: f32[8,128], index: 3, kind: output, shape index: {}]
  %s4 = sld [smem:[#allocation0]]
  $region30: #{tpu_custom_call.1} parent=0
    _
  %s6 = ssub.s32 1, %s4
  %s7 = scalar_select 0, %s6, %s4
  $region1: #{tpu_custom_call.1} parent=0
    #allocation2 [shape = 'u8[65536]{0}', space=vmem, size = 0x10000, scoped, tag = 'input window, operand 0, single buffered']
    #allocation3 [shape = 's32[1]{0}', space=sflag, size = 0x4, scoped, tag = 'scoped memory for tpu_custom_call.1']
    #allocation4 [shape = 's32[1]{0}', space=sflag, size = 0x4, scoped, tag = 'scoped memory for tpu_custom_call.1']
    #allocation5 [shape = 'u8[1048576]{0}', space=vmem, size = 0x100000, scoped, tag = 'input window, operand 1, single buffered']
    #allocation6 [shape = 's32[1]{0}', space=sflag, size = 0x4, scoped, tag = 'scoped memory for tpu_custom_call.1']
    #allocation7 [shape = 'u8[4096]{0}', space=vmem, size = 0x1000, scoped, tag = 'output window, operand 0, single buffered']
    %8 = vsyncpa [#allocation3], 0
    %9 = vsyncpa [#allocation6], 0
    %10 = vsyncpa [#allocation4], 0
    // Predicated region
    $region2: #{tpu_custom_call.1} parent=1 // pred_check
      _
    $region3: #{tpu_custom_call.1} parent=1 // pred_check_branch
      %12 = sbr.rel (0) target = $region5
    $region4: #{tpu_custom_call.1} parent=1 // pred_region
      %14 = vsyncadd [#allocation3], 0
      %s16 = sshll.u32 %s0, 4
      %s17 = int_to_ptr.hbm [resolvable:$true] %s16
      %s18 = sshll.u32 [#allocation2], 4
      %s19 = int_to_ptr.vmem [resolvable:$true] %s18
      %21 = dma.hbm_to_vmem [thread:$0]  %s17, 2048, %s19, [#allocation3]
    $region5: #{tpu_custom_call.1} parent=1 // pred_fallthru
      _
    // Predicated region
    $region6: #{tpu_custom_call.1} parent=1 // pred_check
      _
    $region7: #{tpu_custom_call.1} parent=1 // pred_check_branch
      %23 = sbr.rel (0) target = $region9
    $region8: #{tpu_custom_call.1} parent=1 // pred_region
      %25 = vsyncadd [#allocation6], 0
      %s26 = sshll.u32 %s1, 4
      %s27 = int_to_ptr.hbm [resolvable:$true] %s26
      %s28 = sshll.u32 [#allocation5], 4
      %s29 = int_to_ptr.vmem [resolvable:$true] %s28
      %34 = dma.hbm_to_vmem [thread:$0]  %s27, 32768, %s29, [#allocation6], 2048, 2048, 128
    $region9: #{tpu_custom_call.1} parent=1 // pred_fallthru
      _
    // Predicated region
    $region10: #{tpu_custom_call.1} parent=1 // pred_check
      _
    $region11: #{tpu_custom_call.1} parent=1 // pred_check_branch
      %36 = sbr.rel (0) target = $region13
    $region12: #{tpu_custom_call.1} parent=1 // pred_region
      _
    $region13: #{tpu_custom_call.1} parent=1 // pred_fallthru
      _
    // Predicated region
    $region14: #{tpu_custom_call.1} parent=1 // pred_check
      _
    $region15: #{tpu_custom_call.1} parent=1 // pred_check_branch
      %38 = sbr.rel (0) target = $region17
    $region16: #{tpu_custom_call.1} parent=1 // pred_region
      %40 = dma.done [#allocation3], 2048
    $region17: #{tpu_custom_call.1} parent=1 // pred_fallthru
      _
    // Predicated region
    $region18: #{tpu_custom_call.1} parent=1 // pred_check
      _
    $region19: #{tpu_custom_call.1} parent=1 // pred_check_branch
      %42 = sbr.rel (0) target = $region21
    $region20: #{tpu_custom_call.1} parent=1 // pred_region
      %44 = dma.done [#allocation6], 32768
    $region21: #{tpu_custom_call.1} parent=1 // pred_fallthru
      _
    %v45 = vld [vmem:[#allocation2] sm:$0xff]
    %v46 = vld [vmem:[#allocation2 + $0x8] sm:$0xff]
    %v47 = vld [vmem:[#allocation2 + $0x10] sm:$0xff]
    %v48 = vld [vmem:[#allocation2 + $0x18] sm:$0xff]
    %v49 = vld [vmem:[#allocation2 + $0x20] sm:$0xff]
    %v50 = vld [vmem:[#allocation2 + $0x28] sm:$0xff]
    %v51 = vld [vmem:[#allocation2 + $0x30] sm:$0xff]
    %v52 = vld [vmem:[#allocation2 + $0x38] sm:$0xff]
    %v53 = vld [vmem:[#allocation2 + $0x40] sm:$0xff]
    %v54 = vld [vmem:[#allocation2 + $0x48] sm:$0xff]
    %v55 = vld [vmem:[#allocation2 + $0x50] sm:$0xff]
    %v56 = vld [vmem:[#allocation2 + $0x58] sm:$0xff]
    %v57 = vld [vmem:[#allocation2 + $0x60] sm:$0xff]
    %v58 = vld [vmem:[#allocation2 + $0x68] sm:$0xff]
    %v59 = vld [vmem:[#allocation2 + $0x70] sm:$0xff]
    %v60 = vld [vmem:[#allocation2 + $0x78] sm:$0xff]
    %v61 = vld [vmem:[#allocation5] sm:$0xff]
    %v62 = vld [vmem:[#allocation5 + $0x8] sm:$0xff]
    %v63 = vld [vmem:[#allocation5 + $0x10] sm:$0xff]
    %v64 = vld [vmem:[#allocation5 + $0x18] sm:$0xff]
    %v65 = vld [vmem:[#allocation5 + $0x20] sm:$0xff]
    %v66 = vld [vmem:[#allocation5 + $0x28] sm:$0xff]
    %v67 = vld [vmem:[#allocation5 + $0x30] sm:$0xff]
    %v68 = vld [vmem:[#allocation5 + $0x38] sm:$0xff]
    %v69 = vld [vmem:[#allocation5 + $0x40] sm:$0xff]
    %v70 = vld [vmem:[#allocation5 + $0x48] sm:$0xff]
    %v71 = vld [vmem:[#allocation5 + $0x50] sm:$0xff]
    %v72 = vld [vmem:[#allocation5 + $0x58] sm:$0xff]
    %v73 = vld [vmem:[#allocation5 + $0x60] sm:$0xff]
    %v74 = vld [vmem:[#allocation5 + $0x68] sm:$0xff]
    %v75 = vld [vmem:[#allocation5 + $0x70] sm:$0xff]
    %v76 = vld [vmem:[#allocation5 + $0x78] sm:$0xff]
    %v77 = vld [vmem:[#allocation5 + $0x80] sm:$0xff]
    %v78 = vld [vmem:[#allocation5 + $0x88] sm:$0xff]
    %v79 = vld [vmem:[#allocation5 + $0x90] sm:$0xff]
    %v80 = vld [vmem:[#allocation5 + $0x98] sm:$0xff]
    %v81 = vld [vmem:[#allocation5 + $0xa0] sm:$0xff]
    %v82 = vld [vmem:[#allocation5 + $0xa8] sm:$0xff]
    %v83 = vld [vmem:[#allocation5 + $0xb0] sm:$0xff]
    %v84 = vld [vmem:[#allocation5 + $0xb8] sm:$0xff]
    %v85 = vld [vmem:[#allocation5 + $0xc0] sm:$0xff]
    %v86 = vld [vmem:[#allocation5 + $0xc8] sm:$0xff]
    %v87 = vld [vmem:[#allocation5 + $0xd0] sm:$0xff]
    %v88 = vld [vmem:[#allocation5 + $0xd8] sm:$0xff]
    %v89 = vld [vmem:[#allocation5 + $0xe0] sm:$0xff]
    %v90 = vld [vmem:[#allocation5 + $0xe8] sm:$0xff]
    %v91 = vld [vmem:[#allocation5 + $0xf0] sm:$0xff]
    %v92 = vld [vmem:[#allocation5 + $0xf8] sm:$0xff]
    %v93 = vld [vmem:[#allocation5 + $0x100] sm:$0xff]
    %v94 = vld [vmem:[#allocation5 + $0x108] sm:$0xff]
    %v95 = vld [vmem:[#allocation5 + $0x110] sm:$0xff]
    %v96 = vld [vmem:[#allocation5 + $0x118] sm:$0xff]
    %v97 = vld [vmem:[#allocation5 + $0x120] sm:$0xff]
    %v98 = vld [vmem:[#allocation5 + $0x128] sm:$0xff]
    %v99 = vld [vmem:[#allocation5 + $0x130] sm:$0xff]
    %v100 = vld [vmem:[#allocation5 + $0x138] sm:$0xff]
    %v101 = vld [vmem:[#allocation5 + $0x140] sm:$0xff]
    %v102 = vld [vmem:[#allocation5 + $0x148] sm:$0xff]
    %v103 = vld [vmem:[#allocation5 + $0x150] sm:$0xff]
    %v104 = vld [vmem:[#allocation5 + $0x158] sm:$0xff]
    %v105 = vld [vmem:[#allocation5 + $0x160] sm:$0xff]
    %v106 = vld [vmem:[#allocation5 + $0x168] sm:$0xff]
    %v107 = vld [vmem:[#allocation5 + $0x170] sm:$0xff]
    %v108 = vld [vmem:[#allocation5 + $0x178] sm:$0xff]
    %v109 = vld [vmem:[#allocation5 + $0x180] sm:$0xff]
    %v110 = vld [vmem:[#allocation5 + $0x188] sm:$0xff]
    %v111 = vld [vmem:[#allocation5 + $0x190] sm:$0xff]
    %v112 = vld [vmem:[#allocation5 + $0x198] sm:$0xff]
    %v113 = vld [vmem:[#allocation5 + $0x1a0] sm:$0xff]
    %v114 = vld [vmem:[#allocation5 + $0x1a8] sm:$0xff]
    %v115 = vld [vmem:[#allocation5 + $0x1b0] sm:$0xff]
    %v116 = vld [vmem:[#allocation5 + $0x1b8] sm:$0xff]
    %v117 = vld [vmem:[#allocation5 + $0x1c0] sm:$0xff]
    %v118 = vld [vmem:[#allocation5 + $0x1c8] sm:$0xff]
    %v119 = vld [vmem:[#allocation5 + $0x1d0] sm:$0xff]
    %v120 = vld [vmem:[#allocation5 + $0x1d8] sm:$0xff]
    %v121 = vld [vmem:[#allocation5 + $0x1e0] sm:$0xff]
    %v122 = vld [vmem:[#allocation5 + $0x1e8] sm:$0xff]
    %v123 = vld [vmem:[#allocation5 + $0x1f0] sm:$0xff]
    %v124 = vld [vmem:[#allocation5 + $0x1f8] sm:$0xff]
    %v125 = vld [vmem:[#allocation5 + $0x200] sm:$0xff]
    %v126 = vld [vmem:[#allocation5 + $0x208] sm:$0xff]
    %v127 = vld [vmem:[#allocation5 + $0x210] sm:$0xff]
    %v128 = vld [vmem:[#allocation5 + $0x218] sm:$0xff]
    %v129 = vld [vmem:[#allocation5 + $0x220] sm:$0xff]
    %v130 = vld [vmem:[#allocation5 + $0x228] sm:$0xff]
    %v131 = vld [vmem:[#allocation5 + $0x230] sm:$0xff]
    %v132 = vld [vmem:[#allocation5 + $0x238] sm:$0xff]
    %v133 = vld [vmem:[#allocation5 + $0x240] sm:$0xff]
    %v134 = vld [vmem:[#allocation5 + $0x248] sm:$0xff]
    %v135 = vld [vmem:[#allocation5 + $0x250] sm:$0xff]
    %v136 = vld [vmem:[#allocation5 + $0x258] sm:$0xff]
    %v137 = vld [vmem:[#allocation5 + $0x260] sm:$0xff]
    %v138 = vld [vmem:[#allocation5 + $0x268] sm:$0xff]
    %v139 = vld [vmem:[#allocation5 + $0x270] sm:$0xff]
    %v140 = vld [vmem:[#allocation5 + $0x278] sm:$0xff]
    %v141 = vld [vmem:[#allocation5 + $0x280] sm:$0xff]
    %v142 = vld [vmem:[#allocation5 + $0x288] sm:$0xff]
    %v143 = vld [vmem:[#allocation5 + $0x290] sm:$0xff]
    %v144 = vld [vmem:[#allocation5 + $0x298] sm:$0xff]
    %v145 = vld [vmem:[#allocation5 + $0x2a0] sm:$0xff]
    %v146 = vld [vmem:[#allocation5 + $0x2a8] sm:$0xff]
    %v147 = vld [vmem:[#allocation5 + $0x2b0] sm:$0xff]
    %v148 = vld [vmem:[#allocation5 + $0x2b8] sm:$0xff]
    %v149 = vld [vmem:[#allocation5 + $0x2c0] sm:$0xff]
    %v150 = vld [vmem:[#allocation5 + $0x2c8] sm:$0xff]
    %v151 = vld [vmem:[#allocation5 + $0x2d0] sm:$0xff]
    %v152 = vld [vmem:[#allocation5 + $0x2d8] sm:$0xff]
    %v153 = vld [vmem:[#allocation5 + $0x2e0] sm:$0xff]
    %v154 = vld [vmem:[#allocation5 + $0x2e8] sm:$0xff]
    %v155 = vld [vmem:[#allocation5 + $0x2f0] sm:$0xff]
    %v156 = vld [vmem:[#allocation5 + $0x2f8] sm:$0xff]
    %v157 = vld [vmem:[#allocation5 + $0x300] sm:$0xff]
    %v158 = vld [vmem:[#allocation5 + $0x308] sm:$0xff]
    %v159 = vld [vmem:[#allocation5 + $0x310] sm:$0xff]
    %v160 = vld [vmem:[#allocation5 + $0x318] sm:$0xff]
    %v161 = vld [vmem:[#allocation5 + $0x320] sm:$0xff]
    %v162 = vld [vmem:[#allocation5 + $0x328] sm:$0xff]
    %v163 = vld [vmem:[#allocation5 + $0x330] sm:$0xff]
    %v164 = vld [vmem:[#allocation5 + $0x338] sm:$0xff]
    %v165 = vld [vmem:[#allocation5 + $0x340] sm:$0xff]
    %v166 = vld [vmem:[#allocation5 + $0x348] sm:$0xff]
    %v167 = vld [vmem:[#allocation5 + $0x350] sm:$0xff]
    %v168 = vld [vmem:[#allocation5 + $0x358] sm:$0xff]
    %v169 = vld [vmem:[#allocation5 + $0x360] sm:$0xff]
    %v170 = vld [vmem:[#allocation5 + $0x368] sm:$0xff]
    %v171 = vld [vmem:[#allocation5 + $0x370] sm:$0xff]
    %v172 = vld [vmem:[#allocation5 + $0x378] sm:$0xff]
    %v173 = vld [vmem:[#allocation5 + $0x380] sm:$0xff]
    %v174 = vld [vmem:[#allocation5 + $0x388] sm:$0xff]
    %v175 = vld [vmem:[#allocation5 + $0x390] sm:$0xff]
    %v176 = vld [vmem:[#allocation5 + $0x398] sm:$0xff]
    %v177 = vld [vmem:[#allocation5 + $0x3a0] sm:$0xff]
    %v178 = vld [vmem:[#allocation5 + $0x3a8] sm:$0xff]
    %v179 = vld [vmem:[#allocation5 + $0x3b0] sm:$0xff]
    %v180 = vld [vmem:[#allocation5 + $0x3b8] sm:$0xff]
    %v181 = vld [vmem:[#allocation5 + $0x3c0] sm:$0xff]
    %v182 = vld [vmem:[#allocation5 + $0x3c8] sm:$0xff]
    %v183 = vld [vmem:[#allocation5 + $0x3d0] sm:$0xff]
    %v184 = vld [vmem:[#allocation5 + $0x3d8] sm:$0xff]
    %v185 = vld [vmem:[#allocation5 + $0x3e0] sm:$0xff]
    %v186 = vld [vmem:[#allocation5 + $0x3e8] sm:$0xff]
    %v187 = vld [vmem:[#allocation5 + $0x3f0] sm:$0xff]
    %v188 = vld [vmem:[#allocation5 + $0x3f8] sm:$0xff]
    %v189 = vld [vmem:[#allocation5 + $0x400] sm:$0xff]
    %v190 = vld [vmem:[#allocation5 + $0x408] sm:$0xff]
    %v191 = vld [vmem:[#allocation5 + $0x410] sm:$0xff]
    %v192 = vld [vmem:[#allocation5 + $0x418] sm:$0xff]
    %v193 = vld [vmem:[#allocation5 + $0x420] sm:$0xff]
    %v194 = vld [vmem:[#allocation5 + $0x428] sm:$0xff]
    %v195 = vld [vmem:[#allocation5 + $0x430] sm:$0xff]
    %v196 = vld [vmem:[#allocation5 + $0x438] sm:$0xff]
    %v197 = vld [vmem:[#allocation5 + $0x440] sm:$0xff]
    %v198 = vld [vmem:[#allocation5 + $0x448] sm:$0xff]
    %v199 = vld [vmem:[#allocation5 + $0x450] sm:$0xff]
    %v200 = vld [vmem:[#allocation5 + $0x458] sm:$0xff]
    %v201 = vld [vmem:[#allocation5 + $0x460] sm:$0xff]
    %v202 = vld [vmem:[#allocation5 + $0x468] sm:$0xff]
    %v203 = vld [vmem:[#allocation5 + $0x470] sm:$0xff]
    %v204 = vld [vmem:[#allocation5 + $0x478] sm:$0xff]
    %v205 = vld [vmem:[#allocation5 + $0x480] sm:$0xff]
    %v206 = vld [vmem:[#allocation5 + $0x488] sm:$0xff]
    %v207 = vld [vmem:[#allocation5 + $0x490] sm:$0xff]
    %v208 = vld [vmem:[#allocation5 + $0x498] sm:$0xff]
    %v209 = vld [vmem:[#allocation5 + $0x4a0] sm:$0xff]
    %v210 = vld [vmem:[#allocation5 + $0x4a8] sm:$0xff]
    %v211 = vld [vmem:[#allocation5 + $0x4b0] sm:$0xff]
    %v212 = vld [vmem:[#allocation5 + $0x4b8] sm:$0xff]
    %v213 = vld [vmem:[#allocation5 + $0x4c0] sm:$0xff]
    %v214 = vld [vmem:[#allocation5 + $0x4c8] sm:$0xff]
    %v215 = vld [vmem:[#allocation5 + $0x4d0] sm:$0xff]
    %v216 = vld [vmem:[#allocation5 + $0x4d8] sm:$0xff]
    %v217 = vld [vmem:[#allocation5 + $0x4e0] sm:$0xff]
    %v218 = vld [vmem:[#allocation5 + $0x4e8] sm:$0xff]
    %v219 = vld [vmem:[#allocation5 + $0x4f0] sm:$0xff]
    %v220 = vld [vmem:[#allocation5 + $0x4f8] sm:$0xff]
    %v221 = vld [vmem:[#allocation5 + $0x500] sm:$0xff]
    %v222 = vld [vmem:[#allocation5 + $0x508] sm:$0xff]
    %v223 = vld [vmem:[#allocation5 + $0x510] sm:$0xff]
    %v224 = vld [vmem:[#allocation5 + $0x518] sm:$0xff]
    %v225 = vld [vmem:[#allocation5 + $0x520] sm:$0xff]
    %v226 = vld [vmem:[#allocation5 + $0x528] sm:$0xff]
    %v227 = vld [vmem:[#allocation5 + $0x530] sm:$0xff]
    %v228 = vld [vmem:[#allocation5 + $0x538] sm:$0xff]
    %v229 = vld [vmem:[#allocation5 + $0x540] sm:$0xff]
    %v230 = vld [vmem:[#allocation5 + $0x548] sm:$0xff]
    %v231 = vld [vmem:[#allocation5 + $0x550] sm:$0xff]
    %v232 = vld [vmem:[#allocation5 + $0x558] sm:$0xff]
    %v233 = vld [vmem:[#allocation5 + $0x560] sm:$0xff]
    %v234 = vld [vmem:[#allocation5 + $0x568] sm:$0xff]
    %v235 = vld [vmem:[#allocation5 + $0x570] sm:$0xff]
    %v236 = vld [vmem:[#allocation5 + $0x578] sm:$0xff]
    %v237 = vld [vmem:[#allocation5 + $0x580] sm:$0xff]
    %v238 = vld [vmem:[#allocation5 + $0x588] sm:$0xff]
    %v239 = vld [vmem:[#allocation5 + $0x590] sm:$0xff]
    %v240 = vld [vmem:[#allocation5 + $0x598] sm:$0xff]
    %v241 = vld [vmem:[#allocation5 + $0x5a0] sm:$0xff]
    %v242 = vld [vmem:[#allocation5 + $0x5a8] sm:$0xff]
    %v243 = vld [vmem:[#allocation5 + $0x5b0] sm:$0xff]
    %v244 = vld [vmem:[#allocation5 + $0x5b8] sm:$0xff]
    %v245 = vld [vmem:[#allocation5 + $0x5c0] sm:$0xff]
    %v246 = vld [vmem:[#allocation5 + $0x5c8] sm:$0xff]
    %v247 = vld [vmem:[#allocation5 + $0x5d0] sm:$0xff]
    %v248 = vld [vmem:[#allocation5 + $0x5d8] sm:$0xff]
    %v249 = vld [vmem:[#allocation5 + $0x5e0] sm:$0xff]
    %v250 = vld [vmem:[#allocation5 + $0x5e8] sm:$0xff]
    %v251 = vld [vmem:[#allocation5 + $0x5f0] sm:$0xff]
    %v252 = vld [vmem:[#allocation5 + $0x5f8] sm:$0xff]
    %v253 = vld [vmem:[#allocation5 + $0x600] sm:$0xff]
    %v254 = vld [vmem:[#allocation5 + $0x608] sm:$0xff]
    %v255 = vld [vmem:[#allocation5 + $0x610] sm:$0xff]
    %v256 = vld [vmem:[#allocation5 + $0x618] sm:$0xff]
    %v257 = vld [vmem:[#allocation5 + $0x620] sm:$0xff]
    %v258 = vld [vmem:[#allocation5 + $0x628] sm:$0xff]
    %v259 = vld [vmem:[#allocation5 + $0x630] sm:$0xff]
    %v260 = vld [vmem:[#allocation5 + $0x638] sm:$0xff]
    %v261 = vld [vmem:[#allocation5 + $0x640] sm:$0xff]
    %v262 = vld [vmem:[#allocation5 + $0x648] sm:$0xff]
    %v263 = vld [vmem:[#allocation5 + $0x650] sm:$0xff]
    %v264 = vld [vmem:[#allocation5 + $0x658] sm:$0xff]
    %v265 = vld [vmem:[#allocation5 + $0x660] sm:$0xff]
    %v266 = vld [vmem:[#allocation5 + $0x668] sm:$0xff]
    %v267 = vld [vmem:[#allocation5 + $0x670] sm:$0xff]
    %v268 = vld [vmem:[#allocation5 + $0x678] sm:$0xff]
    %v269 = vld [vmem:[#allocation5 + $0x680] sm:$0xff]
    %v270 = vld [vmem:[#allocation5 + $0x688] sm:$0xff]
    %v271 = vld [vmem:[#allocation5 + $0x690] sm:$0xff]
    %v272 = vld [vmem:[#allocation5 + $0x698] sm:$0xff]
    %v273 = vld [vmem:[#allocation5 + $0x6a0] sm:$0xff]
    %v274 = vld [vmem:[#allocation5 + $0x6a8] sm:$0xff]
    %v275 = vld [vmem:[#allocation5 + $0x6b0] sm:$0xff]
    %v276 = vld [vmem:[#allocation5 + $0x6b8] sm:$0xff]
    %v277 = vld [vmem:[#allocation5 + $0x6c0] sm:$0xff]
    %v278 = vld [vmem:[#allocation5 + $0x6c8] sm:$0xff]
    %v279 = vld [vmem:[#allocation5 + $0x6d0] sm:$0xff]
    %v280 = vld [vmem:[#allocation5 + $0x6d8] sm:$0xff]
    %v281 = vld [vmem:[#allocation5 + $0x6e0] sm:$0xff]
    %v282 = vld [vmem:[#allocation5 + $0x6e8] sm:$0xff]
    %v283 = vld [vmem:[#allocation5 + $0x6f0] sm:$0xff]
    %v284 = vld [vmem:[#allocation5 + $0x6f8] sm:$0xff]
    %v285 = vld [vmem:[#allocation5 + $0x700] sm:$0xff]
    %v286 = vld [vmem:[#allocation5 + $0x708] sm:$0xff]
    %v287 = vld [vmem:[#allocation5 + $0x710] sm:$0xff]
    %v288 = vld [vmem:[#allocation5 + $0x718] sm:$0xff]
    %v289 = vld [vmem:[#allocation5 + $0x720] sm:$0xff]
    %v290 = vld [vmem:[#allocation5 + $0x728] sm:$0xff]
    %v291 = vld [vmem:[#allocation5 + $0x730] sm:$0xff]
    %v292 = vld [vmem:[#allocation5 + $0x738] sm:$0xff]
    %v293 = vld [vmem:[#allocation5 + $0x740] sm:$0xff]
    %v294 = vld [vmem:[#allocation5 + $0x748] sm:$0xff]
    %v295 = vld [vmem:[#allocation5 + $0x750] sm:$0xff]
    %v296 = vld [vmem:[#allocation5 + $0x758] sm:$0xff]
    %v297 = vld [vmem:[#allocation5 + $0x760] sm:$0xff]
    %v298 = vld [vmem:[#allocation5 + $0x768] sm:$0xff]
    %v299 = vld [vmem:[#allocation5 + $0x770] sm:$0xff]
    %v300 = vld [vmem:[#allocation5 + $0x778] sm:$0xff]
    %v301 = vld [vmem:[#allocation5 + $0x780] sm:$0xff]
    %v302 = vld [vmem:[#allocation5 + $0x788] sm:$0xff]
    %v303 = vld [vmem:[#allocation5 + $0x790] sm:$0xff]
    %v304 = vld [vmem:[#allocation5 + $0x798] sm:$0xff]
    %v305 = vld [vmem:[#allocation5 + $0x7a0] sm:$0xff]
    %v306 = vld [vmem:[#allocation5 + $0x7a8] sm:$0xff]
    %v307 = vld [vmem:[#allocation5 + $0x7b0] sm:$0xff]
    %v308 = vld [vmem:[#allocation5 + $0x7b8] sm:$0xff]
    %v309 = vld [vmem:[#allocation5 + $0x7c0] sm:$0xff]
    %v310 = vld [vmem:[#allocation5 + $0x7c8] sm:$0xff]
    %v311 = vld [vmem:[#allocation5 + $0x7d0] sm:$0xff]
    %v312 = vld [vmem:[#allocation5 + $0x7d8] sm:$0xff]
    %v313 = vld [vmem:[#allocation5 + $0x7e0] sm:$0xff]
    %v314 = vld [vmem:[#allocation5 + $0x7e8] sm:$0xff]
    %v315 = vld [vmem:[#allocation5 + $0x7f0] sm:$0xff]
    %v316 = vld [vmem:[#allocation5 + $0x7f8] sm:$0xff]
    %v317 = vld [vmem:[%s2] sm:$0x1]
    %v319 = vperm.slane %v317, 0
    %321 = vmatpush.xpose.msra.mxu0 %v301
    %322 = vmatpush.xpose.msra.mxu0 %v285
    %323 = vmatpush.xpose.msra.mxu0 %v269
    %324 = vmatpush.xpose.msra.mxu0 %v253
    %325 = vmatpush.xpose.msra.mxu0 %v237
    %326 = vmatpush.xpose.msra.mxu0 %v221
    %327 = vmatpush.xpose.msra.mxu0 %v205
    %328 = vmatpush.xpose.msra.mxu0 %v189
    %329 = vmatpush.xpose.msra.mxu0 %v173
    %330 = vmatpush.xpose.msra.mxu0 %v157
    %331 = vmatpush.xpose.msra.mxu0 %v141
    %332 = vmatpush.xpose.msra.mxu0 %v125
    %333 = vmatpush.xpose.msra.mxu0 %v109
    %334 = vmatpush.xpose.msra.mxu0 %v93
    %335 = vmatpush.xpose.msra.mxu0 %v77
    %336 = vmatpush.xpose.msra.mxu0 %v61
    %337 = vmatmul.f32.gmra.mxu0 %v45
    %v338 = vpop.f32.mrf.mxu0
    %v339 = vadd.f32 %v319, %v338
    %340 = vdwg.mxu0
    %341 = vmatpush.xpose.msra.mxu0 %v302
    %342 = vmatpush.xpose.msra.mxu0 %v286
    %343 = vmatpush.xpose.msra.mxu0 %v270
    %344 = vmatpush.xpose.msra.mxu0 %v254
    %345 = vmatpush.xpose.msra.mxu0 %v238
    %346 = vmatpush.xpose.msra.mxu0 %v222
    %347 = vmatpush.xpose.msra.mxu0 %v206
    %348 = vmatpush.xpose.msra.mxu0 %v190
    %349 = vmatpush.xpose.msra.mxu0 %v174
    %350 = vmatpush.xpose.msra.mxu0 %v158
    %351 = vmatpush.xpose.msra.mxu0 %v142
    %352 = vmatpush.xpose.msra.mxu0 %v126
    %353 = vmatpush.xpose.msra.mxu0 %v110
    %354 = vmatpush.xpose.msra.mxu0 %v94
    %355 = vmatpush.xpose.msra.mxu0 %v78
    %356 = vmatpush.xpose.msra.mxu0 %v62
    %357 = vmatmul.f32.gmra.mxu0 %v46
    %v358 = vpop.f32.mrf.mxu0
    %v359 = vadd.f32 %v339, %v358
    %360 = vdwg.mxu0
    %361 = vmatpush.xpose.msra.mxu0 %v303
    %362 = vmatpush.xpose.msra.mxu0 %v287
    %363 = vmatpush.xpose.msra.mxu0 %v271
    %364 = vmatpush.xpose.msra.mxu0 %v255
    %365 = vmatpush.xpose.msra.mxu0 %v239
    %366 = vmatpush.xpose.msra.mxu0 %v223
    %367 = vmatpush.xpose.msra.mxu0 %v207
    %368 = vmatpush.xpose.msra.mxu0 %v191
    %369 = vmatpush.xpose.msra.mxu0 %v175
    %370 = vmatpush.xpose.msra.mxu0 %v159
    %371 = vmatpush.xpose.msra.mxu0 %v143
    %372 = vmatpush.xpose.msra.mxu0 %v127
    %373 = vmatpush.xpose.msra.mxu0 %v111
    %374 = vmatpush.xpose.msra.mxu0 %v95
    %375 = vmatpush.xpose.msra.mxu0 %v79
    %376 = vmatpush.xpose.msra.mxu0 %v63
    %377 = vmatmul.f32.gmra.mxu0 %v47
    %v378 = vpop.f32.mrf.mxu0
    %v379 = vadd.f32 %v359, %v378
    %380 = vdwg.mxu0
    %381 = vmatpush.xpose.msra.mxu0 %v304
    %382 = vmatpush.xpose.msra.mxu0 %v288
    %383 = vmatpush.xpose.msra.mxu0 %v272
    %384 = vmatpush.xpose.msra.mxu0 %v256
    %385 = vmatpush.xpose.msra.mxu0 %v240
    %386 = vmatpush.xpose.msra.mxu0 %v224
    %387 = vmatpush.xpose.msra.mxu0 %v208
    %388 = vmatpush.xpose.msra.mxu0 %v192
    %389 = vmatpush.xpose.msra.mxu0 %v176
    %390 = vmatpush.xpose.msra.mxu0 %v160
    %391 = vmatpush.xpose.msra.mxu0 %v144
    %392 = vmatpush.xpose.msra.mxu0 %v128
    %393 = vmatpush.xpose.msra.mxu0 %v112
    %394 = vmatpush.xpose.msra.mxu0 %v96
    %395 = vmatpush.xpose.msra.mxu0 %v80
    %396 = vmatpush.xpose.msra.mxu0 %v64
    %397 = vmatmul.f32.gmra.mxu0 %v48
    %v398 = vpop.f32.mrf.mxu0
    %v399 = vadd.f32 %v379, %v398
    %400 = vdwg.mxu0
    %401 = vmatpush.xpose.msra.mxu0 %v305
    %402 = vmatpush.xpose.msra.mxu0 %v289
    %403 = vmatpush.xpose.msra.mxu0 %v273
    %404 = vmatpush.xpose.msra.mxu0 %v257
    %405 = vmatpush.xpose.msra.mxu0 %v241
    %406 = vmatpush.xpose.msra.mxu0 %v225
    %407 = vmatpush.xpose.msra.mxu0 %v209
    %408 = vmatpush.xpose.msra.mxu0 %v193
    %409 = vmatpush.xpose.msra.mxu0 %v177
    %410 = vmatpush.xpose.msra.mxu0 %v161
    %411 = vmatpush.xpose.msra.mxu0 %v145
    %412 = vmatpush.xpose.msra.mxu0 %v129
    %413 = vmatpush.xpose.msra.mxu0 %v113
    %414 = vmatpush.xpose.msra.mxu0 %v97
    %415 = vmatpush.xpose.msra.mxu0 %v81
    %416 = vmatpush.xpose.msra.mxu0 %v65
    %417 = vmatmul.f32.gmra.mxu0 %v49
    %v418 = vpop.f32.mrf.mxu0
    %v419 = vadd.f32 %v399, %v418
    %420 = vdwg.mxu0
    %421 = vmatpush.xpose.msra.mxu0 %v306
    %422 = vmatpush.xpose.msra.mxu0 %v290
    %423 = vmatpush.xpose.msra.mxu0 %v274
    %424 = vmatpush.xpose.msra.mxu0 %v258
    %425 = vmatpush.xpose.msra.mxu0 %v242
    %426 = vmatpush.xpose.msra.mxu0 %v226
    %427 = vmatpush.xpose.msra.mxu0 %v210
    %428 = vmatpush.xpose.msra.mxu0 %v194
    %429 = vmatpush.xpose.msra.mxu0 %v178
    %430 = vmatpush.xpose.msra.mxu0 %v162
    %431 = vmatpush.xpose.msra.mxu0 %v146
    %432 = vmatpush.xpose.msra.mxu0 %v130
    %433 = vmatpush.xpose.msra.mxu0 %v114
    %434 = vmatpush.xpose.msra.mxu0 %v98
    %435 = vmatpush.xpose.msra.mxu0 %v82
    %436 = vmatpush.xpose.msra.mxu0 %v66
    %437 = vmatmul.f32.gmra.mxu0 %v50
    %v438 = vpop.f32.mrf.mxu0
    %v439 = vadd.f32 %v419, %v438
    %440 = vdwg.mxu0
    %441 = vmatpush.xpose.msra.mxu0 %v307
    %442 = vmatpush.xpose.msra.mxu0 %v291
    %443 = vmatpush.xpose.msra.mxu0 %v275
    %444 = vmatpush.xpose.msra.mxu0 %v259
    %445 = vmatpush.xpose.msra.mxu0 %v243
    %446 = vmatpush.xpose.msra.mxu0 %v227
    %447 = vmatpush.xpose.msra.mxu0 %v211
    %448 = vmatpush.xpose.msra.mxu0 %v195
    %449 = vmatpush.xpose.msra.mxu0 %v179
    %450 = vmatpush.xpose.msra.mxu0 %v163
    %451 = vmatpush.xpose.msra.mxu0 %v147
    %452 = vmatpush.xpose.msra.mxu0 %v131
    %453 = vmatpush.xpose.msra.mxu0 %v115
    %454 = vmatpush.xpose.msra.mxu0 %v99
    %455 = vmatpush.xpose.msra.mxu0 %v83
    %456 = vmatpush.xpose.msra.mxu0 %v67
    %457 = vmatmul.f32.gmra.mxu0 %v51
    %v458 = vpop.f32.mrf.mxu0
    %v459 = vadd.f32 %v439, %v458
    %460 = vdwg.mxu0
    %461 = vmatpush.xpose.msra.mxu0 %v308
    %462 = vmatpush.xpose.msra.mxu0 %v292
    %463 = vmatpush.xpose.msra.mxu0 %v276
    %464 = vmatpush.xpose.msra.mxu0 %v260
    %465 = vmatpush.xpose.msra.mxu0 %v244
    %466 = vmatpush.xpose.msra.mxu0 %v228
    %467 = vmatpush.xpose.msra.mxu0 %v212
    %468 = vmatpush.xpose.msra.mxu0 %v196
    %469 = vmatpush.xpose.msra.mxu0 %v180
    %470 = vmatpush.xpose.msra.mxu0 %v164
    %471 = vmatpush.xpose.msra.mxu0 %v148
    %472 = vmatpush.xpose.msra.mxu0 %v132
    %473 = vmatpush.xpose.msra.mxu0 %v116
    %474 = vmatpush.xpose.msra.mxu0 %v100
    %475 = vmatpush.xpose.msra.mxu0 %v84
    %476 = vmatpush.xpose.msra.mxu0 %v68
    %477 = vmatmul.f32.gmra.mxu0 %v52
    %v478 = vpop.f32.mrf.mxu0
    %v479 = vadd.f32 %v459, %v478
    %480 = vdwg.mxu0
    %481 = vmatpush.xpose.msra.mxu0 %v309
    %482 = vmatpush.xpose.msra.mxu0 %v293
    %483 = vmatpush.xpose.msra.mxu0 %v277
    %484 = vmatpush.xpose.msra.mxu0 %v261
    %485 = vmatpush.xpose.msra.mxu0 %v245
    %486 = vmatpush.xpose.msra.mxu0 %v229
    %487 = vmatpush.xpose.msra.mxu0 %v213
    %488 = vmatpush.xpose.msra.mxu0 %v197
    %489 = vmatpush.xpose.msra.mxu0 %v181
    %490 = vmatpush.xpose.msra.mxu0 %v165
    %491 = vmatpush.xpose.msra.mxu0 %v149
    %492 = vmatpush.xpose.msra.mxu0 %v133
    %493 = vmatpush.xpose.msra.mxu0 %v117
    %494 = vmatpush.xpose.msra.mxu0 %v101
    %495 = vmatpush.xpose.msra.mxu0 %v85
    %496 = vmatpush.xpose.msra.mxu0 %v69
    %497 = vmatmul.f32.gmra.mxu0 %v53
    %v498 = vpop.f32.mrf.mxu0
    %v499 = vadd.f32 %v479, %v498
    %500 = vdwg.mxu0
    %501 = vmatpush.xpose.msra.mxu0 %v310
    %502 = vmatpush.xpose.msra.mxu0 %v294
    %503 = vmatpush.xpose.msra.mxu0 %v278
    %504 = vmatpush.xpose.msra.mxu0 %v262
    %505 = vmatpush.xpose.msra.mxu0 %v246
    %506 = vmatpush.xpose.msra.mxu0 %v230
    %507 = vmatpush.xpose.msra.mxu0 %v214
    %508 = vmatpush.xpose.msra.mxu0 %v198
    %509 = vmatpush.xpose.msra.mxu0 %v182
    %510 = vmatpush.xpose.msra.mxu0 %v166
    %511 = vmatpush.xpose.msra.mxu0 %v150
    %512 = vmatpush.xpose.msra.mxu0 %v134
    %513 = vmatpush.xpose.msra.mxu0 %v118
    %514 = vmatpush.xpose.msra.mxu0 %v102
    %515 = vmatpush.xpose.msra.mxu0 %v86
    %516 = vmatpush.xpose.msra.mxu0 %v70
    %517 = vmatmul.f32.gmra.mxu0 %v54
    %v518 = vpop.f32.mrf.mxu0
    %v519 = vadd.f32 %v499, %v518
    %520 = vdwg.mxu0
    %521 = vmatpush.xpose.msra.mxu0 %v311
    %522 = vmatpush.xpose.msra.mxu0 %v295
    %523 = vmatpush.xpose.msra.mxu0 %v279
    %524 = vmatpush.xpose.msra.mxu0 %v263
    %525 = vmatpush.xpose.msra.mxu0 %v247
    %526 = vmatpush.xpose.msra.mxu0 %v231
    %527 = vmatpush.xpose.msra.mxu0 %v215
    %528 = vmatpush.xpose.msra.mxu0 %v199
    %529 = vmatpush.xpose.msra.mxu0 %v183
    %530 = vmatpush.xpose.msra.mxu0 %v167
    %531 = vmatpush.xpose.msra.mxu0 %v151
    %532 = vmatpush.xpose.msra.mxu0 %v135
    %533 = vmatpush.xpose.msra.mxu0 %v119
    %534 = vmatpush.xpose.msra.mxu0 %v103
    %535 = vmatpush.xpose.msra.mxu0 %v87
    %536 = vmatpush.xpose.msra.mxu0 %v71
    %537 = vmatmul.f32.gmra.mxu0 %v55
    %v538 = vpop.f32.mrf.mxu0
    %v539 = vadd.f32 %v519, %v538
    %540 = vdwg.mxu0
    %541 = vmatpush.xpose.msra.mxu0 %v312
    %542 = vmatpush.xpose.msra.mxu0 %v296
    %543 = vmatpush.xpose.msra.mxu0 %v280
    %544 = vmatpush.xpose.msra.mxu0 %v264
    %545 = vmatpush.xpose.msra.mxu0 %v248
    %546 = vmatpush.xpose.msra.mxu0 %v232
    %547 = vmatpush.xpose.msra.mxu0 %v216
    %548 = vmatpush.xpose.msra.mxu0 %v200
    %549 = vmatpush.xpose.msra.mxu0 %v184
    %550 = vmatpush.xpose.msra.mxu0 %v168
    %551 = vmatpush.xpose.msra.mxu0 %v152
    %552 = vmatpush.xpose.msra.mxu0 %v136
    %553 = vmatpush.xpose.msra.mxu0 %v120
    %554 = vmatpush.xpose.msra.mxu0 %v104
    %555 = vmatpush.xpose.msra.mxu0 %v88
    %556 = vmatpush.xpose.msra.mxu0 %v72
    %557 = vmatmul.f32.gmra.mxu0 %v56
    %v558 = vpop.f32.mrf.mxu0
    %v559 = vadd.f32 %v539, %v558
    %560 = vdwg.mxu0
    %561 = vmatpush.xpose.msra.mxu0 %v313
    %562 = vmatpush.xpose.msra.mxu0 %v297
    %563 = vmatpush.xpose.msra.mxu0 %v281
    %564 = vmatpush.xpose.msra.mxu0 %v265
    %565 = vmatpush.xpose.msra.mxu0 %v249
    %566 = vmatpush.xpose.msra.mxu0 %v233
    %567 = vmatpush.xpose.msra.mxu0 %v217
    %568 = vmatpush.xpose.msra.mxu0 %v201
    %569 = vmatpush.xpose.msra.mxu0 %v185
    %570 = vmatpush.xpose.msra.mxu0 %v169
    %571 = vmatpush.xpose.msra.mxu0 %v153
    %572 = vmatpush.xpose.msra.mxu0 %v137
    %573 = vmatpush.xpose.msra.mxu0 %v121
    %574 = vmatpush.xpose.msra.mxu0 %v105
    %575 = vmatpush.xpose.msra.mxu0 %v89
    %576 = vmatpush.xpose.msra.mxu0 %v73
    %577 = vmatmul.f32.gmra.mxu0 %v57
    %v578 = vpop.f32.mrf.mxu0
    %v579 = vadd.f32 %v559, %v578
    %580 = vdwg.mxu0
    %581 = vmatpush.xpose.msra.mxu0 %v314
    %582 = vmatpush.xpose.msra.mxu0 %v298
    %583 = vmatpush.xpose.msra.mxu0 %v282
    %584 = vmatpush.xpose.msra.mxu0 %v266
    %585 = vmatpush.xpose.msra.mxu0 %v250
    %586 = vmatpush.xpose.msra.mxu0 %v234
    %587 = vmatpush.xpose.msra.mxu0 %v218
    %588 = vmatpush.xpose.msra.mxu0 %v202
    %589 = vmatpush.xpose.msra.mxu0 %v186
    %590 = vmatpush.xpose.msra.mxu0 %v170
    %591 = vmatpush.xpose.msra.mxu0 %v154
    %592 = vmatpush.xpose.msra.mxu0 %v138
    %593 = vmatpush.xpose.msra.mxu0 %v122
    %594 = vmatpush.xpose.msra.mxu0 %v106
    %595 = vmatpush.xpose.msra.mxu0 %v90
    %596 = vmatpush.xpose.msra.mxu0 %v74
    %597 = vmatmul.f32.gmra.mxu0 %v58
    %v598 = vpop.f32.mrf.mxu0
    %v599 = vadd.f32 %v579, %v598
    %600 = vdwg.mxu0
    %601 = vmatpush.xpose.msra.mxu0 %v315
    %602 = vmatpush.xpose.msra.mxu0 %v299
    %603 = vmatpush.xpose.msra.mxu0 %v283
    %604 = vmatpush.xpose.msra.mxu0 %v267
    %605 = vmatpush.xpose.msra.mxu0 %v251
    %606 = vmatpush.xpose.msra.mxu0 %v235
    %607 = vmatpush.xpose.msra.mxu0 %v219
    %608 = vmatpush.xpose.msra.mxu0 %v203
    %609 = vmatpush.xpose.msra.mxu0 %v187
    %610 = vmatpush.xpose.msra.mxu0 %v171
    %611 = vmatpush.xpose.msra.mxu0 %v155
    %612 = vmatpush.xpose.msra.mxu0 %v139
    %613 = vmatpush.xpose.msra.mxu0 %v123
    %614 = vmatpush.xpose.msra.mxu0 %v107
    %615 = vmatpush.xpose.msra.mxu0 %v91
    %616 = vmatpush.xpose.msra.mxu0 %v75
    %617 = vmatmul.f32.gmra.mxu0 %v59
    %v618 = vpop.f32.mrf.mxu0
    %v619 = vadd.f32 %v599, %v618
    %620 = vdwg.mxu0
    %621 = vmatpush.xpose.msra.mxu0 %v316
    %622 = vmatpush.xpose.msra.mxu0 %v300
    %623 = vmatpush.xpose.msra.mxu0 %v284
    %624 = vmatpush.xpose.msra.mxu0 %v268
    %625 = vmatpush.xpose.msra.mxu0 %v252
    %626 = vmatpush.xpose.msra.mxu0 %v236
    %627 = vmatpush.xpose.msra.mxu0 %v220
    %628 = vmatpush.xpose.msra.mxu0 %v204
    %629 = vmatpush.xpose.msra.mxu0 %v188
    %630 = vmatpush.xpose.msra.mxu0 %v172
    %631 = vmatpush.xpose.msra.mxu0 %v156
    %632 = vmatpush.xpose.msra.mxu0 %v140
    %633 = vmatpush.xpose.msra.mxu0 %v124
    %634 = vmatpush.xpose.msra.mxu0 %v108
    %635 = vmatpush.xpose.msra.mxu0 %v92
    %636 = vmatpush.xpose.msra.mxu0 %v76
    %637 = vmatmul.f32.gmra.mxu0 %v60
    %v638 = vpop.f32.mrf.mxu0
    %v639 = vadd.f32 %v619, %v638
    %640 = vdwg.mxu0
    %641 = vst [vmem:[#allocation7] sm:$0xff] %v639
    // Predicated region
    $region22: #{tpu_custom_call.1} parent=1 // pred_check
      _
    $region23: #{tpu_custom_call.1} parent=1 // pred_check_branch
      %643 = sbr.rel (0) target = $region25
    $region24: #{tpu_custom_call.1} parent=1 // pred_region
      %645 = vsyncadd [#allocation4], 0
      %s647 = sshll.u32 [#allocation7], 4
      %s648 = int_to_ptr.vmem [resolvable:$true] %s647
      %s649 = sshll.u32 %s3, 4
      %s650 = int_to_ptr.hbm [resolvable:$true] %s649
      %652 = dma.vmem_to_hbm [thread:$0]  %s648, 128, %s650, [#allocation4]
    $region25: #{tpu_custom_call.1} parent=1 // pred_fallthru
      _
    // Predicated region
    $region26: #{tpu_custom_call.1} parent=1 // pred_check
      _
    $region27: #{tpu_custom_call.1} parent=1 // pred_check_branch
      %654 = sbr.rel (0) target = $region29
    $region28: #{tpu_custom_call.1} parent=1 // pred_region
      %656 = dma.done [#allocation4], 128
    $region29: #{tpu_custom_call.1} parent=1 // pred_fallthru
      _
    %657 = vsyncpa [#allocation3], 1
    %658 = vsyncpa [#allocation6], 1
    %659 = vsyncpa [#allocation4], 1

</llo_original>
